<compile_context>
chip_gen: v7x
topology: tpu7x:2x2x1
jax: 0.10.0
libtpu: 0.0.40
codegen_flags: <defaults>
</compile_context>

<pallas_src>
import jax
import jax.numpy as jnp
from jax.experimental import pallas as pl
from jax.experimental.pallas import tpu as pltpu


def _scale_mul_kernel(scale_ref, x_ref, o_ref):
    # scale_ref: (TC, 1), x_ref: (TC, HW) -> lane-broadcast multiply on VPU.
    o_ref[...] = scale_ref[...] * x_ref[...]


def channel_scale_mul(scale, x, *, num_blocks=1):
    """Compute scale * x with broadcasting.

    scale: [1, C, 1, 1]
    x    : [1, C, H, W]
    returns [1, C, H, W]

    num_blocks=1 (default) runs the whole op as a single block (best on
    v5e/v6e). num_blocks=2 splits channels in half so v7x's two TensorCores
    can each take one half.
    """
    n, c, h, w = x.shape
    assert n == 1 and scale.shape == (1, c, 1, 1)
    hw = h * w

    # Channel tile must be a multiple of 8 (sublane) unless it covers the
    # full channel dim; fall back to a single block otherwise.
    if num_blocks < 1 or c % num_blocks != 0 or (c // num_blocks) % 8 != 0:
        num_blocks = 1
    tc = c // num_blocks

    x2 = x.reshape(c, hw)
    s2 = scale.reshape(c, 1)

    out2 = pl.pallas_call(
        _scale_mul_kernel,
        out_shape=jax.ShapeDtypeStruct((c, hw), x.dtype),
        grid=(num_blocks,),
        in_specs=[
            pl.BlockSpec((tc, 1), lambda i: (i, 0)),
            pl.BlockSpec((tc, hw), lambda i: (i, 0)),
        ],
        out_specs=pl.BlockSpec((tc, hw), lambda i: (i, 0)),
        compiler_params=pltpu.CompilerParams(
            dimension_semantics=("parallel",)
        ),
    )(s2, x2)

    return out2.reshape(n, c, h, w)


if __name__ == "__main__":
    key = jax.random.PRNGKey(0)
    k1, k2 = jax.random.split(key)

    # Shapes implied by the module's forward:
    #   x256 = [1, 672, 1, 1], x251 = [1, 672, 14, 14]
    C, H, W = 672, 14, 14
    x256 = jax.random.normal(k1, (1, C, 1, 1), dtype=jnp.float32)
    x251 = jax.random.normal(k2, (1, C, H, W), dtype=jnp.float32)

    out = channel_scale_mul(x256, x251)
    out = jax.block_until_ready(out)

    # Correctness check against plain-JAX broadcasting semantics.
    ref = x256 * x251
    assert out.shape == (1, C, H, W)
    assert jnp.allclose(out, ref, atol=1e-6, rtol=1e-6)

    print("KERNEL_OK")
</pallas_src>

<mosaic_0001>
module attributes {stable_mosaic.version = 11 : i64} {
  func.func @_scale_mul_kernel(%arg0: i32, %arg1: memref<672x1xf32, #tpu.memory_space<vmem>>, %arg2: memref<672x196xf32, #tpu.memory_space<vmem>>, %arg3: memref<672x196xf32, #tpu.memory_space<vmem>>) attributes {dimension_semantics = [#tpu.dimension_semantics<parallel>], iteration_bounds = array<i64: 1>, scalar_prefetch = 0 : i64, scratch_operands = 0 : i64, tpu.core_type = #tpu.core_type<tc>, window_params = [{transform_indices = @transform_0, window_bounds = array<i64: 672, 1>}, {transform_indices = @transform_1, window_bounds = array<i64: 672, 196>}, {transform_indices = @transform_2, window_bounds = array<i64: 672, 196>}]} {
    %c0 = arith.constant 0 : index
    %c0_0 = arith.constant 0 : index
    %0 = vector.load %arg1[%c0, %c0_0] : memref<672x1xf32, #tpu.memory_space<vmem>>, vector<672x1xf32>
    %c0_1 = arith.constant 0 : index
    %c0_2 = arith.constant 0 : index
    %1 = vector.load %arg2[%c0_1, %c0_2] : memref<672x196xf32, #tpu.memory_space<vmem>>, vector<672x196xf32>
    %2 = vector.broadcast %0 : vector<672x1xf32> to vector<672x196xf32>
    %3 = arith.mulf %2, %1 : vector<672x196xf32>
    %c0_3 = arith.constant 0 : index
    %c0_4 = arith.constant 0 : index
    %4 = vector.load %arg3[%c0_3, %c0_4] : memref<672x196xf32, #tpu.memory_space<vmem>>, vector<672x196xf32>
    tpu.vector_store %arg3[%c0_3, %c0_4], %3 {strides = array<i32>} : memref<672x196xf32, #tpu.memory_space<vmem>>, vector<672x196xf32>,
    return
  }
  func.func @transform_0(%arg0: i32) -> (i32, i32) {
    %c0_i32 = arith.constant 0 : i32
    %c0_i32_0 = arith.constant 0 : i32
    return %arg0, %c0_i32 : i32, i32
  }
  func.func @transform_1(%arg0: i32) -> (i32, i32) {
    %c0_i32 = arith.constant 0 : i32
    %c0_i32_0 = arith.constant 0 : i32
    return %arg0, %c0_i32 : i32, i32
  }
  func.func @transform_2(%arg0: i32) -> (i32, i32) {
    %c0_i32 = arith.constant 0 : i32
    %c0_i32_0 = arith.constant 0 : i32
    return %arg0, %c0_i32 : i32, i32
  }
}

</mosaic_0001>

<llo_original>
// kernel: tpu_custom_call.1
$region0: #{tpu_custom_call.1}
  #allocation0 [shape = 'u32[]', space=smem, size = 0x4, offset = 0x4, fixed_abs, tag = 'smem constant byte address 0x4 - core index']
  #allocation1 [shape = 'u32[144,128]{1,0:T(1,128)}', space=vmem, size = 0x12000, scoped, tag = 'internal scratch']
  %s0 = inlined_call_operand.vmem [shape: f32[672,1], index: 0, kind: input, shape index: {}]
  %s1 = inlined_call_operand.vmem [shape: f32[672,196], index: 1, kind: input, shape index: {}]
  %s2 = inlined_call_operand.vmem [shape: f32[672,196], index: 2, kind: output, shape index: {}]
  %s3 = sld [smem:[#allocation0]]
  $region18: #{tpu_custom_call.1} parent=0
    _
  %s5 = ssub.s32 1, %s3
  %s6 = scalar_select 0, %s5, %s3
  // Predicated region
  $region2: #{tpu_custom_call.1} parent=0 // pred_check
    _
  $region3: #{tpu_custom_call.1} parent=0 // pred_check_branch
    %8 = sbr.rel (0) target = $region5
  $region4: #{tpu_custom_call.1} parent=0 // pred_region
    _
  $region5: #{tpu_custom_call.1} parent=0 // pred_fallthru
    _
  // Predicated region
  $region6: #{tpu_custom_call.1} parent=0 // pred_check
    _
  $region7: #{tpu_custom_call.1} parent=0 // pred_check_branch
    %10 = sbr.rel (0) target = $region9
  $region8: #{tpu_custom_call.1} parent=0 // pred_region
    _
  $region9: #{tpu_custom_call.1} parent=0 // pred_fallthru
    _
  %v11 = vld [vmem:[%s0] sm:$0xff]
  %v12 = vld [vmem:[%s0 + $0x8] sm:$0xff]
  %v13 = vld [vmem:[%s0 + $0x10] sm:$0xff]
  %v14 = vld [vmem:[%s0 + $0x18] sm:$0xff]
  %v15 = vld [vmem:[%s0 + $0x20] sm:$0xff]
  %v16 = vld [vmem:[%s0 + $0x28] sm:$0xff]
  %v17 = vld [vmem:[%s0 + $0x30] sm:$0xff]
  %v18 = vld [vmem:[%s0 + $0x38] sm:$0xff]
  %v19 = vld [vmem:[%s0 + $0x40] sm:$0xff]
  %v20 = vld [vmem:[%s0 + $0x48] sm:$0xff]
  %v21 = vld [vmem:[%s0 + $0x50] sm:$0xff]
  %v22 = vld [vmem:[%s0 + $0x58] sm:$0xff]
  %v23 = vld [vmem:[%s0 + $0x60] sm:$0xff]
  %v24 = vld [vmem:[%s0 + $0x68] sm:$0xff]
  %v25 = vld [vmem:[%s0 + $0x70] sm:$0xff]
  %v26 = vld [vmem:[%s0 + $0x78] sm:$0xff]
  %v27 = vld [vmem:[%s0 + $0x80] sm:$0xff]
  %v28 = vld [vmem:[%s0 + $0x88] sm:$0xff]
  %v29 = vld [vmem:[%s0 + $0x90] sm:$0xff]
  %v30 = vld [vmem:[%s0 + $0x98] sm:$0xff]
  %v31 = vld [vmem:[%s0 + $0xa0] sm:$0xff]
  %v32 = vld [vmem:[%s0 + $0xa8] sm:$0xff]
  %v33 = vld [vmem:[%s0 + $0xb0] sm:$0xff]
  %v34 = vld [vmem:[%s0 + $0xb8] sm:$0xff]
  %v35 = vld [vmem:[%s0 + $0xc0] sm:$0xff]
  %v36 = vld [vmem:[%s0 + $0xc8] sm:$0xff]
  %v37 = vld [vmem:[%s0 + $0xd0] sm:$0xff]
  %v38 = vld [vmem:[%s0 + $0xd8] sm:$0xff]
  %v39 = vld [vmem:[%s0 + $0xe0] sm:$0xff]
  %v40 = vld [vmem:[%s0 + $0xe8] sm:$0xff]
  %v41 = vld [vmem:[%s0 + $0xf0] sm:$0xff]
  %v42 = vld [vmem:[%s0 + $0xf8] sm:$0xff]
  %v43 = vld [vmem:[%s0 + $0x100] sm:$0xff]
  %v44 = vld [vmem:[%s0 + $0x108] sm:$0xff]
  %v45 = vld [vmem:[%s0 + $0x110] sm:$0xff]
  %v46 = vld [vmem:[%s0 + $0x118] sm:$0xff]
  %v47 = vld [vmem:[%s0 + $0x120] sm:$0xff]
  %v48 = vld [vmem:[%s0 + $0x128] sm:$0xff]
  %v49 = vld [vmem:[%s0 + $0x130] sm:$0xff]
  %v50 = vld [vmem:[%s0 + $0x138] sm:$0xff]
  %v51 = vld [vmem:[%s0 + $0x140] sm:$0xff]
  %v52 = vld [vmem:[%s0 + $0x148] sm:$0xff]
  %v53 = vld [vmem:[%s0 + $0x150] sm:$0xff]
  %v54 = vld [vmem:[%s0 + $0x158] sm:$0xff]
  %v55 = vld [vmem:[%s0 + $0x160] sm:$0xff]
  %v56 = vld [vmem:[%s0 + $0x168] sm:$0xff]
  %v57 = vld [vmem:[%s0 + $0x170] sm:$0xff]
  %v58 = vld [vmem:[%s0 + $0x178] sm:$0xff]
  %v59 = vld [vmem:[%s0 + $0x180] sm:$0xff]
  %v60 = vld [vmem:[%s0 + $0x188] sm:$0xff]
  %v61 = vld [vmem:[%s0 + $0x190] sm:$0xff]
  %v62 = vld [vmem:[%s0 + $0x198] sm:$0xff]
  %v63 = vld [vmem:[%s0 + $0x1a0] sm:$0xff]
  %v64 = vld [vmem:[%s0 + $0x1a8] sm:$0xff]
  %v65 = vld [vmem:[%s0 + $0x1b0] sm:$0xff]
  %v66 = vld [vmem:[%s0 + $0x1b8] sm:$0xff]
  %v67 = vld [vmem:[%s0 + $0x1c0] sm:$0xff]
  %v68 = vld [vmem:[%s0 + $0x1c8] sm:$0xff]
  %v69 = vld [vmem:[%s0 + $0x1d0] sm:$0xff]
  %v70 = vld [vmem:[%s0 + $0x1d8] sm:$0xff]
  %v71 = vld [vmem:[%s0 + $0x1e0] sm:$0xff]
  %v72 = vld [vmem:[%s0 + $0x1e8] sm:$0xff]
  %v73 = vld [vmem:[%s0 + $0x1f0] sm:$0xff]
  %v74 = vld [vmem:[%s0 + $0x1f8] sm:$0xff]
  %v75 = vld [vmem:[%s0 + $0x200] sm:$0xff]
  %v76 = vld [vmem:[%s0 + $0x208] sm:$0xff]
  %v77 = vld [vmem:[%s0 + $0x210] sm:$0xff]
  %v78 = vld [vmem:[%s0 + $0x218] sm:$0xff]
  %v79 = vld [vmem:[%s0 + $0x220] sm:$0xff]
  %v80 = vld [vmem:[%s0 + $0x228] sm:$0xff]
  %v81 = vld [vmem:[%s0 + $0x230] sm:$0xff]
  %v82 = vld [vmem:[%s0 + $0x238] sm:$0xff]
  %v83 = vld [vmem:[%s0 + $0x240] sm:$0xff]
  %v84 = vld [vmem:[%s0 + $0x248] sm:$0xff]
  %v85 = vld [vmem:[%s0 + $0x250] sm:$0xff]
  %v86 = vld [vmem:[%s0 + $0x258] sm:$0xff]
  %v87 = vld [vmem:[%s0 + $0x260] sm:$0xff]
  %v88 = vld [vmem:[%s0 + $0x268] sm:$0xff]
  %v89 = vld [vmem:[%s0 + $0x270] sm:$0xff]
  %v90 = vld [vmem:[%s0 + $0x278] sm:$0xff]
  %v91 = vld [vmem:[%s0 + $0x280] sm:$0xff]
  %v92 = vld [vmem:[%s0 + $0x288] sm:$0xff]
  %v93 = vld [vmem:[%s0 + $0x290] sm:$0xff]
  %v94 = vld [vmem:[%s0 + $0x298] sm:$0xff]
  %v95 = vld [vmem:[%s1] sm:$0xff]
  %v96 = vld [vmem:[%s1 + $0x8] sm:$0xff]
  %v97 = vld [vmem:[%s1 + $0x10] sm:$0xff]
  %v98 = vld [vmem:[%s1 + $0x18] sm:$0xff]
  %v99 = vld [vmem:[%s1 + $0x20] sm:$0xff]
  %v100 = vld [vmem:[%s1 + $0x28] sm:$0xff]
  %v101 = vld [vmem:[%s1 + $0x30] sm:$0xff]
  %v102 = vld [vmem:[%s1 + $0x38] sm:$0xff]
  %v103 = vld [vmem:[%s1 + $0x40] sm:$0xff]
  %v104 = vld [vmem:[%s1 + $0x48] sm:$0xff]
  %v105 = vld [vmem:[%s1 + $0x50] sm:$0xff]
  %v106 = vld [vmem:[%s1 + $0x58] sm:$0xff]
  %v107 = vld [vmem:[%s1 + $0x60] sm:$0xff]
  %v108 = vld [vmem:[%s1 + $0x68] sm:$0xff]
  %v109 = vld [vmem:[%s1 + $0x70] sm:$0xff]
  %v110 = vld [vmem:[%s1 + $0x78] sm:$0xff]
  %v111 = vld [vmem:[%s1 + $0x80] sm:$0xff]
  %v112 = vld [vmem:[%s1 + $0x88] sm:$0xff]
  %v113 = vld [vmem:[%s1 + $0x90] sm:$0xff]
  %v114 = vld [vmem:[%s1 + $0x98] sm:$0xff]
  %v115 = vld [vmem:[%s1 + $0xa0] sm:$0xff]
  %v116 = vld [vmem:[%s1 + $0xa8] sm:$0xff]
  %v117 = vld [vmem:[%s1 + $0xb0] sm:$0xff]
  %v118 = vld [vmem:[%s1 + $0xb8] sm:$0xff]
  %v119 = vld [vmem:[%s1 + $0xc0] sm:$0xff]
  %v120 = vld [vmem:[%s1 + $0xc8] sm:$0xff]
  %v121 = vld [vmem:[%s1 + $0xd0] sm:$0xff]
  %v122 = vld [vmem:[%s1 + $0xd8] sm:$0xff]
  %v123 = vld [vmem:[%s1 + $0xe0] sm:$0xff]
  %v124 = vld [vmem:[%s1 + $0xe8] sm:$0xff]
  %v125 = vld [vmem:[%s1 + $0xf0] sm:$0xff]
  %v126 = vld [vmem:[%s1 + $0xf8] sm:$0xff]
  %v127 = vld [vmem:[%s1 + $0x100] sm:$0xff]
  %v128 = vld [vmem:[%s1 + $0x108] sm:$0xff]
  %v129 = vld [vmem:[%s1 + $0x110] sm:$0xff]
  %v130 = vld [vmem:[%s1 + $0x118] sm:$0xff]
  %v131 = vld [vmem:[%s1 + $0x120] sm:$0xff]
  %v132 = vld [vmem:[%s1 + $0x128] sm:$0xff]
  %v133 = vld [vmem:[%s1 + $0x130] sm:$0xff]
  %v134 = vld [vmem:[%s1 + $0x138] sm:$0xff]
  %v135 = vld [vmem:[%s1 + $0x140] sm:$0xff]
  %v136 = vld [vmem:[%s1 + $0x148] sm:$0xff]
  %v137 = vld [vmem:[%s1 + $0x150] sm:$0xff]
  %v138 = vld [vmem:[%s1 + $0x158] sm:$0xff]
  %v139 = vld [vmem:[%s1 + $0x160] sm:$0xff]
  %v140 = vld [vmem:[%s1 + $0x168] sm:$0xff]
  %v141 = vld [vmem:[%s1 + $0x170] sm:$0xff]
  %v142 = vld [vmem:[%s1 + $0x178] sm:$0xff]
  %v143 = vld [vmem:[%s1 + $0x180] sm:$0xff]
  %v144 = vld [vmem:[%s1 + $0x188] sm:$0xff]
  %v145 = vld [vmem:[%s1 + $0x190] sm:$0xff]
  %v146 = vld [vmem:[%s1 + $0x198] sm:$0xff]
  %v147 = vld [vmem:[%s1 + $0x1a0] sm:$0xff]
  %v148 = vld [vmem:[%s1 + $0x1a8] sm:$0xff]
  %v149 = vld [vmem:[%s1 + $0x1b0] sm:$0xff]
  %v150 = vld [vmem:[%s1 + $0x1b8] sm:$0xff]
  %v151 = vld [vmem:[%s1 + $0x1c0] sm:$0xff]
  %v152 = vld [vmem:[%s1 + $0x1c8] sm:$0xff]
  %v153 = vld [vmem:[%s1 + $0x1d0] sm:$0xff]
  %v154 = vld [vmem:[%s1 + $0x1d8] sm:$0xff]
  %v155 = vld [vmem:[%s1 + $0x1e0] sm:$0xff]
  %v156 = vld [vmem:[%s1 + $0x1e8] sm:$0xff]
  %v157 = vld [vmem:[%s1 + $0x1f0] sm:$0xff]
  %v158 = vld [vmem:[%s1 + $0x1f8] sm:$0xff]
  %v159 = vld [vmem:[%s1 + $0x200] sm:$0xff]
  %v160 = vld [vmem:[%s1 + $0x208] sm:$0xff]
  %v161 = vld [vmem:[%s1 + $0x210] sm:$0xff]
  %v162 = vld [vmem:[%s1 + $0x218] sm:$0xff]
  %v163 = vld [vmem:[%s1 + $0x220] sm:$0xff]
  %v164 = vld [vmem:[%s1 + $0x228] sm:$0xff]
  %v165 = vld [vmem:[%s1 + $0x230] sm:$0xff]
  %v166 = vld [vmem:[%s1 + $0x238] sm:$0xff]
  %v167 = vld [vmem:[%s1 + $0x240] sm:$0xff]
  %v168 = vld [vmem:[%s1 + $0x248] sm:$0xff]
  %v169 = vld [vmem:[%s1 + $0x250] sm:$0xff]
  %v170 = vld [vmem:[%s1 + $0x258] sm:$0xff]
  %v171 = vld [vmem:[%s1 + $0x260] sm:$0xff]
  %v172 = vld [vmem:[%s1 + $0x268] sm:$0xff]
  %v173 = vld [vmem:[%s1 + $0x270] sm:$0xff]
  %v174 = vld [vmem:[%s1 + $0x278] sm:$0xff]
  %v175 = vld [vmem:[%s1 + $0x280] sm:$0xff]
  %v176 = vld [vmem:[%s1 + $0x288] sm:$0xff]
  %v177 = vld [vmem:[%s1 + $0x290] sm:$0xff]
  %v178 = vld [vmem:[%s1 + $0x298] sm:$0xff]
  %v179 = vld [vmem:[%s1 + $0x2a0] sm:$0xff]
  %v180 = vld [vmem:[%s1 + $0x2a8] sm:$0xff]
  %v181 = vld [vmem:[%s1 + $0x2b0] sm:$0xff]
  %v182 = vld [vmem:[%s1 + $0x2b8] sm:$0xff]
  %v183 = vld [vmem:[%s1 + $0x2c0] sm:$0xff]
  %v184 = vld [vmem:[%s1 + $0x2c8] sm:$0xff]
  %v185 = vld [vmem:[%s1 + $0x2d0] sm:$0xff]
  %v186 = vld [vmem:[%s1 + $0x2d8] sm:$0xff]
  %v187 = vld [vmem:[%s1 + $0x2e0] sm:$0xff]
  %v188 = vld [vmem:[%s1 + $0x2e8] sm:$0xff]
  %v189 = vld [vmem:[%s1 + $0x2f0] sm:$0xff]
  %v190 = vld [vmem:[%s1 + $0x2f8] sm:$0xff]
  %v191 = vld [vmem:[%s1 + $0x300] sm:$0xff]
  %v192 = vld [vmem:[%s1 + $0x308] sm:$0xff]
  %v193 = vld [vmem:[%s1 + $0x310] sm:$0xff]
  %v194 = vld [vmem:[%s1 + $0x318] sm:$0xff]
  %v195 = vld [vmem:[%s1 + $0x320] sm:$0xff]
  %v196 = vld [vmem:[%s1 + $0x328] sm:$0xff]
  %v197 = vld [vmem:[%s1 + $0x330] sm:$0xff]
  %v198 = vld [vmem:[%s1 + $0x338] sm:$0xff]
  %v199 = vld [vmem:[%s1 + $0x340] sm:$0xff]
  %v200 = vld [vmem:[%s1 + $0x348] sm:$0xff]
  %v201 = vld [vmem:[%s1 + $0x350] sm:$0xff]
  %v202 = vld [vmem:[%s1 + $0x358] sm:$0xff]
  %v203 = vld [vmem:[%s1 + $0x360] sm:$0xff]
  %v204 = vld [vmem:[%s1 + $0x368] sm:$0xff]
  %v205 = vld [vmem:[%s1 + $0x370] sm:$0xff]
  %v206 = vld [vmem:[%s1 + $0x378] sm:$0xff]
  %v207 = vld [vmem:[%s1 + $0x380] sm:$0xff]
  %v208 = vld [vmem:[%s1 + $0x388] sm:$0xff]
  %v209 = vld [vmem:[%s1 + $0x390] sm:$0xff]
  %v210 = vld [vmem:[%s1 + $0x398] sm:$0xff]
  %v211 = vld [vmem:[%s1 + $0x3a0] sm:$0xff]
  %v212 = vld [vmem:[%s1 + $0x3a8] sm:$0xff]
  %v213 = vld [vmem:[%s1 + $0x3b0] sm:$0xff]
  %v214 = vld [vmem:[%s1 + $0x3b8] sm:$0xff]
  %v215 = vld [vmem:[%s1 + $0x3c0] sm:$0xff]
  %v216 = vld [vmem:[%s1 + $0x3c8] sm:$0xff]
  %v217 = vld [vmem:[%s1 + $0x3d0] sm:$0xff]
  %v218 = vld [vmem:[%s1 + $0x3d8] sm:$0xff]
  %v219 = vld [vmem:[%s1 + $0x3e0] sm:$0xff]
  %v220 = vld [vmem:[%s1 + $0x3e8] sm:$0xff]
  %v221 = vld [vmem:[%s1 + $0x3f0] sm:$0xff]
  %v222 = vld [vmem:[%s1 + $0x3f8] sm:$0xff]
  %v223 = vld [vmem:[%s1 + $0x400] sm:$0xff]
  %v224 = vld [vmem:[%s1 + $0x408] sm:$0xff]
  %v225 = vld [vmem:[%s1 + $0x410] sm:$0xff]
  %v226 = vld [vmem:[%s1 + $0x418] sm:$0xff]
  %v227 = vld [vmem:[%s1 + $0x420] sm:$0xff]
  %v228 = vld [vmem:[%s1 + $0x428] sm:$0xff]
  %v229 = vld [vmem:[%s1 + $0x430] sm:$0xff]
  %v230 = vld [vmem:[%s1 + $0x438] sm:$0xff]
  %v231 = vld [vmem:[%s1 + $0x440] sm:$0xff]
  %v232 = vld [vmem:[%s1 + $0x448] sm:$0xff]
  %v233 = vld [vmem:[%s1 + $0x450] sm:$0xff]
  %v234 = vld [vmem:[%s1 + $0x458] sm:$0xff]
  %v235 = vld [vmem:[%s1 + $0x460] sm:$0xff]
  %v236 = vld [vmem:[%s1 + $0x468] sm:$0xff]
  %v237 = vld [vmem:[%s1 + $0x470] sm:$0xff]
  %v238 = vld [vmem:[%s1 + $0x478] sm:$0xff]
  %v239 = vld [vmem:[%s1 + $0x480] sm:$0xff]
  %v240 = vld [vmem:[%s1 + $0x488] sm:$0xff]
  %v241 = vld [vmem:[%s1 + $0x490] sm:$0xff]
  %v242 = vld [vmem:[%s1 + $0x498] sm:$0xff]
  %v243 = vld [vmem:[%s1 + $0x4a0] sm:$0xff]
  %v244 = vld [vmem:[%s1 + $0x4a8] sm:$0xff]
  %v245 = vld [vmem:[%s1 + $0x4b0] sm:$0xff]
  %v246 = vld [vmem:[%s1 + $0x4b8] sm:$0xff]
  %v247 = vld [vmem:[%s1 + $0x4c0] sm:$0xff]
  %v248 = vld [vmem:[%s1 + $0x4c8] sm:$0xff]
  %v249 = vld [vmem:[%s1 + $0x4d0] sm:$0xff]
  %v250 = vld [vmem:[%s1 + $0x4d8] sm:$0xff]
  %v251 = vld [vmem:[%s1 + $0x4e0] sm:$0xff]
  %v252 = vld [vmem:[%s1 + $0x4e8] sm:$0xff]
  %v253 = vld [vmem:[%s1 + $0x4f0] sm:$0xff]
  %v254 = vld [vmem:[%s1 + $0x4f8] sm:$0xff]
  %v255 = vld [vmem:[%s1 + $0x500] sm:$0xff]
  %v256 = vld [vmem:[%s1 + $0x508] sm:$0xff]
  %v257 = vld [vmem:[%s1 + $0x510] sm:$0xff]
  %v258 = vld [vmem:[%s1 + $0x518] sm:$0xff]
  %v259 = vld [vmem:[%s1 + $0x520] sm:$0xff]
  %v260 = vld [vmem:[%s1 + $0x528] sm:$0xff]
  %v261 = vld [vmem:[%s1 + $0x530] sm:$0xff]
  %v262 = vld [vmem:[%s1 + $0x538] sm:$0xff]
  %264 = vset.pattern.permute.xlu0 0
  %265 = vperm.xlu0 %264, %v11
  %v266 = vpop.permute.xlu0 %265
  %269 = vset.pattern.permute.xlu0 0
  %270 = vperm.xlu0 %269, %v12
  %v271 = vpop.permute.xlu0 %270
  %274 = vset.pattern.permute.xlu0 0
  %275 = vperm.xlu0 %274, %v13
  %v276 = vpop.permute.xlu0 %275
  %279 = vset.pattern.permute.xlu0 0
  %280 = vperm.xlu0 %279, %v14
  %v281 = vpop.permute.xlu0 %280
  %284 = vset.pattern.permute.xlu0 0
  %285 = vperm.xlu0 %284, %v15
  %v286 = vpop.permute.xlu0 %285
  %289 = vset.pattern.permute.xlu0 0
  %290 = vperm.xlu0 %289, %v16
  %v291 = vpop.permute.xlu0 %290
  %294 = vset.pattern.permute.xlu0 0
  %295 = vperm.xlu0 %294, %v17
  %v296 = vpop.permute.xlu0 %295
  %299 = vset.pattern.permute.xlu0 0
  %300 = vperm.xlu0 %299, %v18
  %v301 = vpop.permute.xlu0 %300
  %304 = vset.pattern.permute.xlu0 0
  %305 = vperm.xlu0 %304, %v19
  %v306 = vpop.permute.xlu0 %305
  %309 = vset.pattern.permute.xlu0 0
  %310 = vperm.xlu0 %309, %v20
  %v311 = vpop.permute.xlu0 %310
  %314 = vset.pattern.permute.xlu0 0
  %315 = vperm.xlu0 %314, %v21
  %v316 = vpop.permute.xlu0 %315
  %319 = vset.pattern.permute.xlu0 0
  %320 = vperm.xlu0 %319, %v22
  %v321 = vpop.permute.xlu0 %320
  %324 = vset.pattern.permute.xlu0 0
  %325 = vperm.xlu0 %324, %v23
  %v326 = vpop.permute.xlu0 %325
  %329 = vset.pattern.permute.xlu0 0
  %330 = vperm.xlu0 %329, %v24
  %v331 = vpop.permute.xlu0 %330
  %334 = vset.pattern.permute.xlu0 0
  %335 = vperm.xlu0 %334, %v25
  %v336 = vpop.permute.xlu0 %335
  %339 = vset.pattern.permute.xlu0 0
  %340 = vperm.xlu0 %339, %v26
  %v341 = vpop.permute.xlu0 %340
  %344 = vset.pattern.permute.xlu0 0
  %345 = vperm.xlu0 %344, %v27
  %v346 = vpop.permute.xlu0 %345
  %349 = vset.pattern.permute.xlu0 0
  %350 = vperm.xlu0 %349, %v28
  %v351 = vpop.permute.xlu0 %350
  %354 = vset.pattern.permute.xlu0 0
  %355 = vperm.xlu0 %354, %v29
  %v356 = vpop.permute.xlu0 %355
  %359 = vset.pattern.permute.xlu0 0
  %360 = vperm.xlu0 %359, %v30
  %v361 = vpop.permute.xlu0 %360
  %364 = vset.pattern.permute.xlu0 0
  %365 = vperm.xlu0 %364, %v31
  %v366 = vpop.permute.xlu0 %365
  %369 = vset.pattern.permute.xlu0 0
  %370 = vperm.xlu0 %369, %v32
  %v371 = vpop.permute.xlu0 %370
  %374 = vset.pattern.permute.xlu0 0
  %375 = vperm.xlu0 %374, %v33
  %v376 = vpop.permute.xlu0 %375
  %379 = vset.pattern.permute.xlu0 0
  %380 = vperm.xlu0 %379, %v34
  %v381 = vpop.permute.xlu0 %380
  %384 = vset.pattern.permute.xlu0 0
  %385 = vperm.xlu0 %384, %v35
  %v386 = vpop.permute.xlu0 %385
  %389 = vset.pattern.permute.xlu0 0
  %390 = vperm.xlu0 %389, %v36
  %v391 = vpop.permute.xlu0 %390
  %394 = vset.pattern.permute.xlu0 0
  %395 = vperm.xlu0 %394, %v37
  %v396 = vpop.permute.xlu0 %395
  %399 = vset.pattern.permute.xlu0 0
  %400 = vperm.xlu0 %399, %v38
  %v401 = vpop.permute.xlu0 %400
  %404 = vset.pattern.permute.xlu0 0
  %405 = vperm.xlu0 %404, %v39
  %v406 = vpop.permute.xlu0 %405
  %409 = vset.pattern.permute.xlu0 0
  %410 = vperm.xlu0 %409, %v40
  %v411 = vpop.permute.xlu0 %410
  %414 = vset.pattern.permute.xlu0 0
  %415 = vperm.xlu0 %414, %v41
  %v416 = vpop.permute.xlu0 %415
  %419 = vset.pattern.permute.xlu0 0
  %420 = vperm.xlu0 %419, %v42
  %v421 = vpop.permute.xlu0 %420
  %424 = vset.pattern.permute.xlu0 0
  %425 = vperm.xlu0 %424, %v43
  %v426 = vpop.permute.xlu0 %425
  %429 = vset.pattern.permute.xlu0 0
  %430 = vperm.xlu0 %429, %v44
  %v431 = vpop.permute.xlu0 %430
  %434 = vset.pattern.permute.xlu0 0
  %435 = vperm.xlu0 %434, %v45
  %v436 = vpop.permute.xlu0 %435
  %439 = vset.pattern.permute.xlu0 0
  %440 = vperm.xlu0 %439, %v46
  %v441 = vpop.permute.xlu0 %440
  %444 = vset.pattern.permute.xlu0 0
  %445 = vperm.xlu0 %444, %v47
  %v446 = vpop.permute.xlu0 %445
  %449 = vset.pattern.permute.xlu0 0
  %450 = vperm.xlu0 %449, %v48
  %v451 = vpop.permute.xlu0 %450
  %454 = vset.pattern.permute.xlu0 0
  %455 = vperm.xlu0 %454, %v49
  %v456 = vpop.permute.xlu0 %455
  %459 = vset.pattern.permute.xlu0 0
  %460 = vperm.xlu0 %459, %v50
  %v461 = vpop.permute.xlu0 %460
  %464 = vset.pattern.permute.xlu0 0
  %465 = vperm.xlu0 %464, %v51
  %v466 = vpop.permute.xlu0 %465
  %469 = vset.pattern.permute.xlu0 0
  %470 = vperm.xlu0 %469, %v52
  %v471 = vpop.permute.xlu0 %470
  %474 = vset.pattern.permute.xlu0 0
  %475 = vperm.xlu0 %474, %v53
  %v476 = vpop.permute.xlu0 %475
  %479 = vset.pattern.permute.xlu0 0
  %480 = vperm.xlu0 %479, %v54
  %v481 = vpop.permute.xlu0 %480
  %484 = vset.pattern.permute.xlu0 0
  %485 = vperm.xlu0 %484, %v55
  %v486 = vpop.permute.xlu0 %485
  %489 = vset.pattern.permute.xlu0 0
  %490 = vperm.xlu0 %489, %v56
  %v491 = vpop.permute.xlu0 %490
  %494 = vset.pattern.permute.xlu0 0
  %495 = vperm.xlu0 %494, %v57
  %v496 = vpop.permute.xlu0 %495
  %499 = vset.pattern.permute.xlu0 0
  %500 = vperm.xlu0 %499, %v58
  %v501 = vpop.permute.xlu0 %500
  %504 = vset.pattern.permute.xlu0 0
  %505 = vperm.xlu0 %504, %v59
  %v506 = vpop.permute.xlu0 %505
  %509 = vset.pattern.permute.xlu0 0
  %510 = vperm.xlu0 %509, %v60
  %v511 = vpop.permute.xlu0 %510
  %514 = vset.pattern.permute.xlu0 0
  %515 = vperm.xlu0 %514, %v61
  %v516 = vpop.permute.xlu0 %515
  %519 = vset.pattern.permute.xlu0 0
  %520 = vperm.xlu0 %519, %v62
  %v521 = vpop.permute.xlu0 %520
  %524 = vset.pattern.permute.xlu0 0
  %525 = vperm.xlu0 %524, %v63
  %v526 = vpop.permute.xlu0 %525
  %529 = vset.pattern.permute.xlu0 0
  %530 = vperm.xlu0 %529, %v64
  %v531 = vpop.permute.xlu0 %530
  %534 = vset.pattern.permute.xlu0 0
  %535 = vperm.xlu0 %534, %v65
  %v536 = vpop.permute.xlu0 %535
  %539 = vset.pattern.permute.xlu0 0
  %540 = vperm.xlu0 %539, %v66
  %v541 = vpop.permute.xlu0 %540
  %544 = vset.pattern.permute.xlu0 0
  %545 = vperm.xlu0 %544, %v67
  %v546 = vpop.permute.xlu0 %545
  %549 = vset.pattern.permute.xlu0 0
  %550 = vperm.xlu0 %549, %v68
  %v551 = vpop.permute.xlu0 %550
  %554 = vset.pattern.permute.xlu0 0
  %555 = vperm.xlu0 %554, %v69
  %v556 = vpop.permute.xlu0 %555
  %559 = vset.pattern.permute.xlu0 0
  %560 = vperm.xlu0 %559, %v70
  %v561 = vpop.permute.xlu0 %560
  %564 = vset.pattern.permute.xlu0 0
  %565 = vperm.xlu0 %564, %v71
  %v566 = vpop.permute.xlu0 %565
  %569 = vset.pattern.permute.xlu0 0
  %570 = vperm.xlu0 %569, %v72
  %v571 = vpop.permute.xlu0 %570
  %574 = vset.pattern.permute.xlu0 0
  %575 = vperm.xlu0 %574, %v73
  %v576 = vpop.permute.xlu0 %575
  %579 = vset.pattern.permute.xlu0 0
  %580 = vperm.xlu0 %579, %v74
  %v581 = vpop.permute.xlu0 %580
  %584 = vset.pattern.permute.xlu0 0
  %585 = vperm.xlu0 %584, %v75
  %v586 = vpop.permute.xlu0 %585
  %589 = vset.pattern.permute.xlu0 0
  %590 = vperm.xlu0 %589, %v76
  %v591 = vpop.permute.xlu0 %590
  %594 = vset.pattern.permute.xlu0 0
  %595 = vperm.xlu0 %594, %v77
  %v596 = vpop.permute.xlu0 %595
  %599 = vset.pattern.permute.xlu0 0
  %600 = vperm.xlu0 %599, %v78
  %v601 = vpop.permute.xlu0 %600
  %604 = vset.pattern.permute.xlu0 0
  %605 = vperm.xlu0 %604, %v79
  %v606 = vpop.permute.xlu0 %605
  %609 = vset.pattern.permute.xlu0 0
  %610 = vperm.xlu0 %609, %v80
  %v611 = vpop.permute.xlu0 %610
  %614 = vset.pattern.permute.xlu0 0
  %615 = vperm.xlu0 %614, %v81
  %v616 = vpop.permute.xlu0 %615
  %619 = vset.pattern.permute.xlu0 0
  %620 = vperm.xlu0 %619, %v82
  %v621 = vpop.permute.xlu0 %620
  %624 = vset.pattern.permute.xlu0 0
  %625 = vperm.xlu0 %624, %v83
  %v626 = vpop.permute.xlu0 %625
  %629 = vset.pattern.permute.xlu0 0
  %630 = vperm.xlu0 %629, %v84
  %v631 = vpop.permute.xlu0 %630
  %634 = vset.pattern.permute.xlu0 0
  %635 = vperm.xlu0 %634, %v85
  %v636 = vpop.permute.xlu0 %635
  %639 = vset.pattern.permute.xlu0 0
  %640 = vperm.xlu0 %639, %v86
  %v641 = vpop.permute.xlu0 %640
  %644 = vset.pattern.permute.xlu0 0
  %645 = vperm.xlu0 %644, %v87
  %v646 = vpop.permute.xlu0 %645
  %649 = vset.pattern.permute.xlu0 0
  %650 = vperm.xlu0 %649, %v88
  %v651 = vpop.permute.xlu0 %650
  %654 = vset.pattern.permute.xlu0 0
  %655 = vperm.xlu0 %654, %v89
  %v656 = vpop.permute.xlu0 %655
  %659 = vset.pattern.permute.xlu0 0
  %660 = vperm.xlu0 %659, %v90
  %v661 = vpop.permute.xlu0 %660
  %664 = vset.pattern.permute.xlu0 0
  %665 = vperm.xlu0 %664, %v91
  %v666 = vpop.permute.xlu0 %665
  %669 = vset.pattern.permute.xlu0 0
  %670 = vperm.xlu0 %669, %v92
  %v671 = vpop.permute.xlu0 %670
  %674 = vset.pattern.permute.xlu0 0
  %675 = vperm.xlu0 %674, %v93
  %v676 = vpop.permute.xlu0 %675
  %679 = vset.pattern.permute.xlu0 0
  %680 = vperm.xlu0 %679, %v94
  %v681 = vpop.permute.xlu0 %680
  %v683 = vmul.f32 %v266, %v95
  %v684 = vmul.f32 %v266, %v96
  %v685 = vmul.f32 %v271, %v97
  %v686 = vmul.f32 %v271, %v98
  %v687 = vmul.f32 %v276, %v99
  %v688 = vmul.f32 %v276, %v100
  %v689 = vmul.f32 %v281, %v101
  %v690 = vmul.f32 %v281, %v102
  %v691 = vmul.f32 %v286, %v103
  %v692 = vmul.f32 %v286, %v104
  %v693 = vmul.f32 %v291, %v105
  %v694 = vmul.f32 %v291, %v106
  %v695 = vmul.f32 %v296, %v107
  %v696 = vmul.f32 %v296, %v108
  %v697 = vmul.f32 %v301, %v109
  %v698 = vmul.f32 %v301, %v110
  %v699 = vmul.f32 %v306, %v111
  %v700 = vmul.f32 %v306, %v112
  %v701 = vmul.f32 %v311, %v113
  %v702 = vmul.f32 %v311, %v114
  %v703 = vmul.f32 %v316, %v115
  %v704 = vmul.f32 %v316, %v116
  %v705 = vmul.f32 %v321, %v117
  %v706 = vmul.f32 %v321, %v118
  %v707 = vmul.f32 %v326, %v119
  %v708 = vmul.f32 %v326, %v120
  %v709 = vmul.f32 %v331, %v121
  %v710 = vmul.f32 %v331, %v122
  %v711 = vmul.f32 %v336, %v123
  %v712 = vmul.f32 %v336, %v124
  %v713 = vmul.f32 %v341, %v125
  %v714 = vmul.f32 %v341, %v126
  %v715 = vmul.f32 %v346, %v127
  %v716 = vmul.f32 %v346, %v128
  %v717 = vmul.f32 %v351, %v129
  %v718 = vmul.f32 %v351, %v130
  %v719 = vmul.f32 %v356, %v131
  %v720 = vmul.f32 %v356, %v132
  %v721 = vmul.f32 %v361, %v133
  %v722 = vmul.f32 %v361, %v134
  %v723 = vmul.f32 %v366, %v135
  %v724 = vmul.f32 %v366, %v136
  %v725 = vmul.f32 %v371, %v137
  %v726 = vmul.f32 %v371, %v138
  %v727 = vmul.f32 %v376, %v139
  %v728 = vmul.f32 %v376, %v140
  %v729 = vmul.f32 %v381, %v141
  %v730 = vmul.f32 %v381, %v142
  %v731 = vmul.f32 %v386, %v143
  %v732 = vmul.f32 %v386, %v144
  %v733 = vmul.f32 %v391, %v145
  %v734 = vmul.f32 %v391, %v146
  %v735 = vmul.f32 %v396, %v147
  %v736 = vmul.f32 %v396, %v148
  %v737 = vmul.f32 %v401, %v149
  %v738 = vmul.f32 %v401, %v150
  %v739 = vmul.f32 %v406, %v151
  %v740 = vmul.f32 %v406, %v152
  %v741 = vmul.f32 %v411, %v153
  %v742 = vmul.f32 %v411, %v154
  %v743 = vmul.f32 %v416, %v155
  %v744 = vmul.f32 %v416, %v156
  %v745 = vmul.f32 %v421, %v157
  %v746 = vmul.f32 %v421, %v158
  %v747 = vmul.f32 %v426, %v159
  %v748 = vmul.f32 %v426, %v160
  %v749 = vmul.f32 %v431, %v161
  %v750 = vmul.f32 %v431, %v162
  %v751 = vmul.f32 %v436, %v163
  %v752 = vmul.f32 %v436, %v164
  %v753 = vmul.f32 %v441, %v165
  %v754 = vmul.f32 %v441, %v166
  %v755 = vmul.f32 %v446, %v167
  %v756 = vmul.f32 %v446, %v168
  %v757 = vmul.f32 %v451, %v169
  %v758 = vmul.f32 %v451, %v170
  %v759 = vmul.f32 %v456, %v171
  %v760 = vmul.f32 %v456, %v172
  %v761 = vmul.f32 %v461, %v173
  %v762 = vmul.f32 %v461, %v174
  %v763 = vmul.f32 %v466, %v175
  %v764 = vmul.f32 %v466, %v176
  %v765 = vmul.f32 %v471, %v177
  %v766 = vmul.f32 %v471, %v178
  %v767 = vmul.f32 %v476, %v179
  %v768 = vmul.f32 %v476, %v180
  %v769 = vmul.f32 %v481, %v181
  %v770 = vmul.f32 %v481, %v182
  %v771 = vmul.f32 %v486, %v183
  %v772 = vmul.f32 %v486, %v184
  %v773 = vmul.f32 %v491, %v185
  %v774 = vmul.f32 %v491, %v186
  %v775 = vmul.f32 %v496, %v187
  %v776 = vmul.f32 %v496, %v188
  %v777 = vmul.f32 %v501, %v189
  %v778 = vmul.f32 %v501, %v190
  %v779 = vmul.f32 %v506, %v191
  %v780 = vmul.f32 %v506, %v192
  %v781 = vmul.f32 %v511, %v193
  %v782 = vmul.f32 %v511, %v194
  %v783 = vmul.f32 %v516, %v195
  %v784 = vmul.f32 %v516, %v196
  %v785 = vmul.f32 %v521, %v197
  %v786 = vmul.f32 %v521, %v198
  %v787 = vmul.f32 %v526, %v199
  %v788 = vmul.f32 %v526, %v200
  %v789 = vmul.f32 %v531, %v201
  %v790 = vmul.f32 %v531, %v202
  %v791 = vmul.f32 %v536, %v203
  %v792 = vmul.f32 %v536, %v204
  %v793 = vmul.f32 %v541, %v205
  %v794 = vmul.f32 %v541, %v206
  %v795 = vmul.f32 %v546, %v207
  %v796 = vmul.f32 %v546, %v208
  %v797 = vmul.f32 %v551, %v209
  %v798 = vmul.f32 %v551, %v210
  %v799 = vmul.f32 %v556, %v211
  %v800 = vmul.f32 %v556, %v212
  %v801 = vmul.f32 %v561, %v213
  %v802 = vmul.f32 %v561, %v214
  %v803 = vmul.f32 %v566, %v215
  %v804 = vmul.f32 %v566, %v216
  %v805 = vmul.f32 %v571, %v217
  %v806 = vmul.f32 %v571, %v218
  %v807 = vmul.f32 %v576, %v219
  %v808 = vmul.f32 %v576, %v220
  %v809 = vmul.f32 %v581, %v221
  %v810 = vmul.f32 %v581, %v222
  %v811 = vmul.f32 %v586, %v223
  %v812 = vmul.f32 %v586, %v224
  %v813 = vmul.f32 %v591, %v225
  %v814 = vmul.f32 %v591, %v226
  %v815 = vmul.f32 %v596, %v227
  %v816 = vmul.f32 %v596, %v228
  %v817 = vmul.f32 %v601, %v229
  %v818 = vmul.f32 %v601, %v230
  %v819 = vmul.f32 %v606, %v231
  %v820 = vmul.f32 %v606, %v232
  %v821 = vmul.f32 %v611, %v233
  %v822 = vmul.f32 %v611, %v234
  %v823 = vmul.f32 %v616, %v235
  %v824 = vmul.f32 %v616, %v236
  %v825 = vmul.f32 %v621, %v237
  %v826 = vmul.f32 %v621, %v238
  %v827 = vmul.f32 %v626, %v239
  %v828 = vmul.f32 %v626, %v240
  %v829 = vmul.f32 %v631, %v241
  %v830 = vmul.f32 %v631, %v242
  %v831 = vmul.f32 %v636, %v243
  %v832 = vmul.f32 %v636, %v244
  %v833 = vmul.f32 %v641, %v245
  %v834 = vmul.f32 %v641, %v246
  %v835 = vmul.f32 %v646, %v247
  %v836 = vmul.f32 %v646, %v248
  %v837 = vmul.f32 %v651, %v249
  %v838 = vmul.f32 %v651, %v250
  %v839 = vmul.f32 %v656, %v251
  %v840 = vmul.f32 %v656, %v252
  %v841 = vmul.f32 %v661, %v253
  %v842 = vmul.f32 %v661, %v254
  %v843 = vmul.f32 %v666, %v255
  %v844 = vmul.f32 %v666, %v256
  %v845 = vmul.f32 %v671, %v257
  %v846 = vmul.f32 %v671, %v258
  %v847 = vmul.f32 %v676, %v259
  %v848 = vmul.f32 %v676, %v260
  %v849 = vmul.f32 %v681, %v261
  %v850 = vmul.f32 %v681, %v262
  %851 = vst [vmem:[%s2] sm:$0xff] %v683
  %vm852 = vcmask 556032
  %853 = vst.msk [vmem:[%s2 + $0x8] sm:$0xff] %vm852, %v684
  %854 = vst [vmem:[%s2 + $0x10] sm:$0xff] %v685
  %855 = vst.msk [vmem:[%s2 + $0x18] sm:$0xff] %vm852, %v686
  %856 = vst [vmem:[%s2 + $0x20] sm:$0xff] %v687
  %857 = vst.msk [vmem:[%s2 + $0x28] sm:$0xff] %vm852, %v688
  %858 = vst [vmem:[%s2 + $0x30] sm:$0xff] %v689
  %859 = vst.msk [vmem:[%s2 + $0x38] sm:$0xff] %vm852, %v690
  %860 = vst [vmem:[%s2 + $0x40] sm:$0xff] %v691
  %861 = vst.msk [vmem:[%s2 + $0x48] sm:$0xff] %vm852, %v692
  %862 = vst [vmem:[%s2 + $0x50] sm:$0xff] %v693
  %863 = vst.msk [vmem:[%s2 + $0x58] sm:$0xff] %vm852, %v694
  %864 = vst [vmem:[%s2 + $0x60] sm:$0xff] %v695
  %865 = vst.msk [vmem:[%s2 + $0x68] sm:$0xff] %vm852, %v696
  %866 = vst [vmem:[%s2 + $0x70] sm:$0xff] %v697
  %867 = vst.msk [vmem:[%s2 + $0x78] sm:$0xff] %vm852, %v698
  %868 = vst [vmem:[%s2 + $0x80] sm:$0xff] %v699
  %869 = vst.msk [vmem:[%s2 + $0x88] sm:$0xff] %vm852, %v700
  %870 = vst [vmem:[%s2 + $0x90] sm:$0xff] %v701
  %871 = vst.msk [vmem:[%s2 + $0x98] sm:$0xff] %vm852, %v702
  %872 = vst [vmem:[%s2 + $0xa0] sm:$0xff] %v703
  %873 = vst.msk [vmem:[%s2 + $0xa8] sm:$0xff] %vm852, %v704
  %874 = vst [vmem:[%s2 + $0xb0] sm:$0xff] %v705
  %875 = vst.msk [vmem:[%s2 + $0xb8] sm:$0xff] %vm852, %v706
  %876 = vst [vmem:[%s2 + $0xc0] sm:$0xff] %v707
  %877 = vst.msk [vmem:[%s2 + $0xc8] sm:$0xff] %vm852, %v708
  %878 = vst [vmem:[%s2 + $0xd0] sm:$0xff] %v709
  %879 = vst.msk [vmem:[%s2 + $0xd8] sm:$0xff] %vm852, %v710
  %880 = vst [vmem:[%s2 + $0xe0] sm:$0xff] %v711
  %881 = vst.msk [vmem:[%s2 + $0xe8] sm:$0xff] %vm852, %v712
  %882 = vst [vmem:[%s2 + $0xf0] sm:$0xff] %v713
  %883 = vst.msk [vmem:[%s2 + $0xf8] sm:$0xff] %vm852, %v714
  %884 = vst [vmem:[%s2 + $0x100] sm:$0xff] %v715
  %885 = vst.msk [vmem:[%s2 + $0x108] sm:$0xff] %vm852, %v716
  %886 = vst [vmem:[%s2 + $0x110] sm:$0xff] %v717
  %887 = vst.msk [vmem:[%s2 + $0x118] sm:$0xff] %vm852, %v718
  %888 = vst [vmem:[%s2 + $0x120] sm:$0xff] %v719
  %889 = vst.msk [vmem:[%s2 + $0x128] sm:$0xff] %vm852, %v720
  %890 = vst [vmem:[%s2 + $0x130] sm:$0xff] %v721
  %891 = vst.msk [vmem:[%s2 + $0x138] sm:$0xff] %vm852, %v722
  %892 = vst [vmem:[%s2 + $0x140] sm:$0xff] %v723
  %893 = vst.msk [vmem:[%s2 + $0x148] sm:$0xff] %vm852, %v724
  %894 = vst [vmem:[%s2 + $0x150] sm:$0xff] %v725
  %895 = vst.msk [vmem:[%s2 + $0x158] sm:$0xff] %vm852, %v726
  %896 = vst [vmem:[%s2 + $0x160] sm:$0xff] %v727
  %897 = vst.msk [vmem:[%s2 + $0x168] sm:$0xff] %vm852, %v728
  %898 = vst [vmem:[%s2 + $0x170] sm:$0xff] %v729
  %899 = vst.msk [vmem:[%s2 + $0x178] sm:$0xff] %vm852, %v730
  %900 = vst [vmem:[%s2 + $0x180] sm:$0xff] %v731
  %901 = vst.msk [vmem:[%s2 + $0x188] sm:$0xff] %vm852, %v732
  %902 = vst [vmem:[%s2 + $0x190] sm:$0xff] %v733
  %903 = vst.msk [vmem:[%s2 + $0x198] sm:$0xff] %vm852, %v734
  %904 = vst [vmem:[%s2 + $0x1a0] sm:$0xff] %v735
  %905 = vst.msk [vmem:[%s2 + $0x1a8] sm:$0xff] %vm852, %v736
  %906 = vst [vmem:[%s2 + $0x1b0] sm:$0xff] %v737
  %907 = vst.msk [vmem:[%s2 + $0x1b8] sm:$0xff] %vm852, %v738
  %908 = vst [vmem:[%s2 + $0x1c0] sm:$0xff] %v739
  %909 = vst.msk [vmem:[%s2 + $0x1c8] sm:$0xff] %vm852, %v740
  %910 = vst [vmem:[%s2 + $0x1d0] sm:$0xff] %v741
  %911 = vst.msk [vmem:[%s2 + $0x1d8] sm:$0xff] %vm852, %v742
  %912 = vst [vmem:[%s2 + $0x1e0] sm:$0xff] %v743
  %913 = vst.msk [vmem:[%s2 + $0x1e8] sm:$0xff] %vm852, %v744
  %914 = vst [vmem:[%s2 + $0x1f0] sm:$0xff] %v745
  %915 = vst.msk [vmem:[%s2 + $0x1f8] sm:$0xff] %vm852, %v746
  %916 = vst [vmem:[%s2 + $0x200] sm:$0xff] %v747
  %917 = vst.msk [vmem:[%s2 + $0x208] sm:$0xff] %vm852, %v748
  %918 = vst [vmem:[%s2 + $0x210] sm:$0xff] %v749
  %919 = vst.msk [vmem:[%s2 + $0x218] sm:$0xff] %vm852, %v750
  %920 = vst [vmem:[%s2 + $0x220] sm:$0xff] %v751
  %921 = vst.msk [vmem:[%s2 + $0x228] sm:$0xff] %vm852, %v752
  %922 = vst [vmem:[%s2 + $0x230] sm:$0xff] %v753
  %923 = vst.msk [vmem:[%s2 + $0x238] sm:$0xff] %vm852, %v754
  %924 = vst [vmem:[%s2 + $0x240] sm:$0xff] %v755
  %925 = vst.msk [vmem:[%s2 + $0x248] sm:$0xff] %vm852, %v756
  %926 = vst [vmem:[%s2 + $0x250] sm:$0xff] %v757
  %927 = vst.msk [vmem:[%s2 + $0x258] sm:$0xff] %vm852, %v758
  %928 = vst [vmem:[%s2 + $0x260] sm:$0xff] %v759
  %929 = vst.msk [vmem:[%s2 + $0x268] sm:$0xff] %vm852, %v760
  %930 = vst [vmem:[%s2 + $0x270] sm:$0xff] %v761
  %931 = vst.msk [vmem:[%s2 + $0x278] sm:$0xff] %vm852, %v762
  %932 = vst [vmem:[%s2 + $0x280] sm:$0xff] %v763
  %933 = vst.msk [vmem:[%s2 + $0x288] sm:$0xff] %vm852, %v764
  %934 = vst [vmem:[%s2 + $0x290] sm:$0xff] %v765
  %935 = vst.msk [vmem:[%s2 + $0x298] sm:$0xff] %vm852, %v766
  %936 = vst [vmem:[%s2 + $0x2a0] sm:$0xff] %v767
  %937 = vst.msk [vmem:[%s2 + $0x2a8] sm:$0xff] %vm852, %v768
  %938 = vst [vmem:[%s2 + $0x2b0] sm:$0xff] %v769
  %939 = vst.msk [vmem:[%s2 + $0x2b8] sm:$0xff] %vm852, %v770
  %940 = vst [vmem:[%s2 + $0x2c0] sm:$0xff] %v771
  %941 = vst.msk [vmem:[%s2 + $0x2c8] sm:$0xff] %vm852, %v772
  %942 = vst [vmem:[%s2 + $0x2d0] sm:$0xff] %v773
  %943 = vst.msk [vmem:[%s2 + $0x2d8] sm:$0xff] %vm852, %v774
  %944 = vst [vmem:[%s2 + $0x2e0] sm:$0xff] %v775
  %945 = vst.msk [vmem:[%s2 + $0x2e8] sm:$0xff] %vm852, %v776
  %946 = vst [vmem:[%s2 + $0x2f0] sm:$0xff] %v777
  %947 = vst.msk [vmem:[%s2 + $0x2f8] sm:$0xff] %vm852, %v778
  %948 = vst [vmem:[%s2 + $0x300] sm:$0xff] %v779
  %949 = vst.msk [vmem:[%s2 + $0x308] sm:$0xff] %vm852, %v780
  %950 = vst [vmem:[%s2 + $0x310] sm:$0xff] %v781
  %951 = vst.msk [vmem:[%s2 + $0x318] sm:$0xff] %vm852, %v782
  %952 = vst [vmem:[%s2 + $0x320] sm:$0xff] %v783
  %953 = vst.msk [vmem:[%s2 + $0x328] sm:$0xff] %vm852, %v784
  %954 = vst [vmem:[%s2 + $0x330] sm:$0xff] %v785
  %955 = vst.msk [vmem:[%s2 + $0x338] sm:$0xff] %vm852, %v786
  %956 = vst [vmem:[%s2 + $0x340] sm:$0xff] %v787
  %957 = vst.msk [vmem:[%s2 + $0x348] sm:$0xff] %vm852, %v788
  %958 = vst [vmem:[%s2 + $0x350] sm:$0xff] %v789
  %959 = vst.msk [vmem:[%s2 + $0x358] sm:$0xff] %vm852, %v790
  %960 = vst [vmem:[%s2 + $0x360] sm:$0xff] %v791
  %961 = vst.msk [vmem:[%s2 + $0x368] sm:$0xff] %vm852, %v792
  %962 = vst [vmem:[%s2 + $0x370] sm:$0xff] %v793
  %963 = vst.msk [vmem:[%s2 + $0x378] sm:$0xff] %vm852, %v794
  %964 = vst [vmem:[%s2 + $0x380] sm:$0xff] %v795
  %965 = vst.msk [vmem:[%s2 + $0x388] sm:$0xff] %vm852, %v796
  %966 = vst [vmem:[%s2 + $0x390] sm:$0xff] %v797
  %967 = vst.msk [vmem:[%s2 + $0x398] sm:$0xff] %vm852, %v798
  %968 = vst [vmem:[%s2 + $0x3a0] sm:$0xff] %v799
  %969 = vst.msk [vmem:[%s2 + $0x3a8] sm:$0xff] %vm852, %v800
  %970 = vst [vmem:[%s2 + $0x3b0] sm:$0xff] %v801
  %971 = vst.msk [vmem:[%s2 + $0x3b8] sm:$0xff] %vm852, %v802
  %972 = vst [vmem:[%s2 + $0x3c0] sm:$0xff] %v803
  %973 = vst.msk [vmem:[%s2 + $0x3c8] sm:$0xff] %vm852, %v804
  %974 = vst [vmem:[%s2 + $0x3d0] sm:$0xff] %v805
  %975 = vst.msk [vmem:[%s2 + $0x3d8] sm:$0xff] %vm852, %v806
  %976 = vst [vmem:[%s2 + $0x3e0] sm:$0xff] %v807
  %977 = vst.msk [vmem:[%s2 + $0x3e8] sm:$0xff] %vm852, %v808
  %978 = vst [vmem:[%s2 + $0x3f0] sm:$0xff] %v809
  %979 = vst.msk [vmem:[%s2 + $0x3f8] sm:$0xff] %vm852, %v810
  %980 = vst [vmem:[%s2 + $0x400] sm:$0xff] %v811
  %981 = vst.msk [vmem:[%s2 + $0x408] sm:$0xff] %vm852, %v812
  %982 = vst [vmem:[%s2 + $0x410] sm:$0xff] %v813
  %983 = vst.msk [vmem:[%s2 + $0x418] sm:$0xff] %vm852, %v814
  %984 = vst [vmem:[%s2 + $0x420] sm:$0xff] %v815
  %985 = vst.msk [vmem:[%s2 + $0x428] sm:$0xff] %vm852, %v816
  %986 = vst [vmem:[%s2 + $0x430] sm:$0xff] %v817
  %987 = vst.msk [vmem:[%s2 + $0x438] sm:$0xff] %vm852, %v818
  %988 = vst [vmem:[%s2 + $0x440] sm:$0xff] %v819
  %989 = vst.msk [vmem:[%s2 + $0x448] sm:$0xff] %vm852, %v820
  %990 = vst [vmem:[%s2 + $0x450] sm:$0xff] %v821
  %991 = vst.msk [vmem:[%s2 + $0x458] sm:$0xff] %vm852, %v822
  %992 = vst [vmem:[%s2 + $0x460] sm:$0xff] %v823
  %993 = vst.msk [vmem:[%s2 + $0x468] sm:$0xff] %vm852, %v824
  %994 = vst [vmem:[%s2 + $0x470] sm:$0xff] %v825
  %995 = vst.msk [vmem:[%s2 + $0x478] sm:$0xff] %vm852, %v826
  %996 = vst [vmem:[%s2 + $0x480] sm:$0xff] %v827
  %997 = vst.msk [vmem:[%s2 + $0x488] sm:$0xff] %vm852, %v828
  %998 = vst [vmem:[%s2 + $0x490] sm:$0xff] %v829
  %999 = vst.msk [vmem:[%s2 + $0x498] sm:$0xff] %vm852, %v830
  %1000 = vst [vmem:[%s2 + $0x4a0] sm:$0xff] %v831
  %1001 = vst.msk [vmem:[%s2 + $0x4a8] sm:$0xff] %vm852, %v832
  %1002 = vst [vmem:[%s2 + $0x4b0] sm:$0xff] %v833
  %1003 = vst.msk [vmem:[%s2 + $0x4b8] sm:$0xff] %vm852, %v834
  %1004 = vst [vmem:[%s2 + $0x4c0] sm:$0xff] %v835
  %1005 = vst.msk [vmem:[%s2 + $0x4c8] sm:$0xff] %vm852, %v836
  %1006 = vst [vmem:[%s2 + $0x4d0] sm:$0xff] %v837
  %1007 = vst.msk [vmem:[%s2 + $0x4d8] sm:$0xff] %vm852, %v838
  %1008 = vst [vmem:[%s2 + $0x4e0] sm:$0xff] %v839
  %1009 = vst.msk [vmem:[%s2 + $0x4e8] sm:$0xff] %vm852, %v840
  %1010 = vst [vmem:[%s2 + $0x4f0] sm:$0xff] %v841
  %1011 = vst.msk [vmem:[%s2 + $0x4f8] sm:$0xff] %vm852, %v842
  %1012 = vst [vmem:[%s2 + $0x500] sm:$0xff] %v843
  %1013 = vst.msk [vmem:[%s2 + $0x508] sm:$0xff] %vm852, %v844
  %1014 = vst [vmem:[%s2 + $0x510] sm:$0xff] %v845
  %1015 = vst.msk [vmem:[%s2 + $0x518] sm:$0xff] %vm852, %v846
  %1016 = vst [vmem:[%s2 + $0x520] sm:$0xff] %v847
  %1017 = vst.msk [vmem:[%s2 + $0x528] sm:$0xff] %vm852, %v848
  %1018 = vst [vmem:[%s2 + $0x530] sm:$0xff] %v849
  %1019 = vst.msk [vmem:[%s2 + $0x538] sm:$0xff] %vm852, %v850
  // Predicated region
  $region10: #{tpu_custom_call.1} parent=0 // pred_check
    _
  $region11: #{tpu_custom_call.1} parent=0 // pred_check_branch
    %1021 = sbr.rel (0) target = $region13
  $region12: #{tpu_custom_call.1} parent=0 // pred_region
    _
  $region13: #{tpu_custom_call.1} parent=0 // pred_fallthru
    _
  // Predicated region
  $region14: #{tpu_custom_call.1} parent=0 // pred_check
    _
  $region15: #{tpu_custom_call.1} parent=0 // pred_check_branch
    %1023 = sbr.rel (0) target = $region17
  $region16: #{tpu_custom_call.1} parent=0 // pred_region
    _
  $region17: #{tpu_custom_call.1} parent=0 // pred_fallthru
    _

</llo_original>
